<compile_context>
chip_gen: v7x
topology: tpu7x:2x2x1
jax: 0.10.0
libtpu: 0.0.40
codegen_flags: <defaults>
</compile_context>

<pallas_src>
import functools

import jax
import jax.numpy as jnp
import numpy as np
from jax.experimental import pallas as pl
from jax.experimental.pallas import tpu as pltpu

LANES = 128
SUBLANES = 8


def _pwlinear_kernel(da_ref, db_ref, x_ref, o_ref, *, thresholds, b_base):
    """Per-region affine transform on one tile (elementwise; rank-agnostic).

    da_ref, db_ref : SMEM f32[n_bp]  per-breakpoint slope / intercept jumps
    x_ref, o_ref   : VMEM f32 tile, either (tr, 128) or 1-D (blk,)
    thresholds     : tuple of Python floats (descending); predicate is x <= t_k,
                     which equals -x >= b_k exactly (f32 negation is exact)
    b_base         : intercept of the region above all breakpoints (== delta)
    """
    x = x_ref[...]
    zero = jnp.float32(0.0)

    # k = 0: fold the base region values into the first select
    # (slope base is 0, intercept base is b_base).
    p = x <= thresholds[0]
    a_acc = jnp.where(p, da_ref[0], zero)
    b_acc = jnp.where(p, b_base + db_ref[0], jnp.float32(b_base))

    for k in range(1, len(thresholds)):          # small static unrolled chain
        p = x <= thresholds[k]
        a_acc = a_acc + jnp.where(p, da_ref[k], zero)
        b_acc = b_acc + jnp.where(p, db_ref[k], zero)

    o_ref[...] = a_acc * x + b_acc


def _affine_params(slops, delta):
    """Per-breakpoint (slope, intercept) jumps of the piecewise-affine output.

    With uniform knots steps_j = steps_0 + j*delta, let the ordered breakpoints
    (in -x space) be b = [steps_0 - delta, steps_0, ..., steps_S].  In the region
    where exactly r breakpoints satisfy -x >= b_k:
        acc1_r = cum|slops|[clip(r-1, 0, S+1)],  acc2_r = cum|slops|[clip(r, 0, S+1)]
        out = A_r * x + B_r,   A_r = acc2_r - acc1_r,
        B_r = -(acc1_r - 1) * delta * (1 + acc1_r - acc2_r)
    Returns dA, dB with dX[k] = X_{k+1} - X_k (the jump when crossing b_k).
    """
    a = jnp.abs(jnp.asarray(slops, jnp.float32))
    n_knots = a.shape[0]                                     # S + 1
    cum = jnp.concatenate([jnp.zeros((1,), jnp.float32), jnp.cumsum(a)])
    r = jnp.arange(n_knots + 2)                              # regions 0 .. S+2
    acc1 = cum[jnp.clip(r - 1, 0, n_knots)]
    acc2 = cum[jnp.clip(r, 0, n_knots)]
    A = acc2 - acc1
    B = -(acc1 - 1.0) * jnp.float32(delta) * (1.0 + acc1 - acc2)
    return A[1:] - A[:-1], B[1:] - B[:-1]                    # each (S+2,)


def _tile_rows(rows, block_rows):
    """>=256-row floor, ~4 blocks (v7x megacore), multiple of 8, capped at rows."""
    if rows <= 256:
        return rows                       # single block; block == full dim is legal
    tr = max(256, pl.cdiv(rows, 4))
    tr = min(tr, block_rows, rows)
    return max(SUBLANES, (tr // SUBLANES) * SUBLANES)


def piecewise_linear(x, steps, slops, delta, *, block_rows=2048):
    """Pallas wrapper.  x: (N, 1) or (N,) float32.  Returns (N,) float32.

    `steps`/`delta` are the module's fixed buffers and are folded into the kernel
    as compile-time thresholds; `slops` (learnable) enters through tiny SMEM
    dA/dB arrays, so this stays jit-able over `x` and `slops`.
    """
    xf = x.reshape(-1).astype(jnp.float32)
    n = int(xf.shape[0])

    # Breakpoints b_k in -x space (ascending) -> thresholds t_k = -b_k for x <= t_k.
    steps_np = np.asarray(jax.device_get(steps), dtype=np.float32)
    d = float(delta)
    bkpts = np.concatenate([[steps_np[0] - np.float32(d)], steps_np]).astype(np.float32)
    thresholds = tuple(float(-b) for b in bkpts)
    dA, dB = _affine_params(slops, d)

    kernel = functools.partial(_pwlinear_kernel, thresholds=thresholds, b_base=d)
    smem_spec = pl.BlockSpec(memory_space=pltpu.MemorySpace.SMEM)

    rows = pl.cdiv(n, LANES)
    tr = _tile_rows(rows, block_rows)

    if n % LANES == 0:
        # Lane-dense (rows, 128) slab: the reshape is free (no pad / slice copies).
        x_op = xf.reshape(rows, LANES)
        block = (tr, LANES)
        index_map = lambda i: (i, 0)
        grid = (pl.cdiv(rows, tr),)
    else:
        # Ragged N: run directly on the flat array with 128-aligned 1-D blocks and
        # a Pallas partial final block -- no jnp.pad / [:n] HBM round trips.
        x_op = xf
        blk = tr * LANES
        if blk >= n:
            blk = n                        # single block == full array dim (legal)
        block = (blk,)
        index_map = lambda i: (i,)
        grid = (pl.cdiv(n, blk),)

    out = pl.pallas_call(
        kernel,
        out_shape=jax.ShapeDtypeStruct(x_op.shape, jnp.float32),
        grid=grid,
        in_specs=[smem_spec, smem_spec, pl.BlockSpec(block, index_map)],
        out_specs=pl.BlockSpec(block, index_map),
        compiler_params=pltpu.CompilerParams(
            dimension_semantics=("parallel",)),              # shards blocks on v7x
    )(dA, dB, x_op)

    return out.reshape(-1)


def piecewise_linear_ref(x, steps, slops, delta):
    """Pure-JAX reference mirroring the PyTorch forward exactly."""
    neg = -x.reshape(-1, 1)                                  # (N, 1)
    a = jnp.abs(slops)[None, :]                              # (1, S+1)
    v1 = (jnp.sum((neg >= steps[None, :]) * a, axis=1) - 1.0) * delta
    v2 = (jnp.sum((neg + delta >= steps[None, :]) * a, axis=1) - 1.0) * delta
    final = v1 + (v2 - v1) / delta * (neg.reshape(-1) - v1)
    return -final


if __name__ == "__main__":
    segments = 16
    logitrange = 100.0

    # Fixed (non-learnable) buffers, exactly as in __init__.
    delta = logitrange / segments                            # 6.25 (exact in f32)
    steps = jnp.linspace(0.0, logitrange, segments + 1, dtype=jnp.float32)

    # Learnable slopes: __init__ uses ones; perturb deterministically so the
    # abs()/region path is actually exercised.
    key = jax.random.PRNGKey(0)
    k_slops, k_x = jax.random.split(key)
    slops = (jnp.ones(segments + 1, dtype=jnp.float32)
             + 0.5 * jax.random.normal(k_slops, (segments + 1,), dtype=jnp.float32))

    # Coverage:
    #   256    : tiny (N,1) input, 2-D path, single block
    #   4096   : N % 128 == 0, 2-D path, single block
    #   2500   : ragged, 1-D path, single (full-dim) block
    #   40960  : 2-D path, rows=320 -> tr=256, 2 blocks incl. a partial last block
    #   35000  : ragged, 1-D path, blk=256*128, 2 blocks incl. a partial last block
    for N in (256, 4096, 2500, 40960, 35000):
        kx = jax.random.fold_in(k_x, N)
        x = -logitrange * jax.random.uniform(kx, (N, 1), dtype=jnp.float32)

        out = jax.block_until_ready(piecewise_linear(x, steps, slops, delta))
        ref = piecewise_linear_ref(x, steps, slops, delta)
        assert out.shape == (N,)

        # The transform is discontinuous at the knots; for inputs within ~an ulp
        # of a knot the kernel's (exactly equivalent in real arithmetic) shared
        # predicates may fall on the other side of the jump than the literal
        # torch expression.  Exclude that measure-zero neighbourhood from the
        # comparison (mirrors the perf-review correctness note).
        y = -x.reshape(-1)
        frac = y / delta
        dist = jnp.abs(frac - jnp.round(frac)) * delta
        safe = dist > 1e-3
        err = float(jnp.max(jnp.where(safe, jnp.abs(out - ref), 0.0)))
        assert err < 5e-3, f"N={N}: max abs err {err}"

    print("KERNEL_OK")
</pallas_src>

<mosaic_0001>
module attributes {stable_mosaic.version = 11 : i64} {
  func.func @_pwlinear_kernel(%arg0: i32, %arg1: memref<18xf32, #tpu.memory_space<smem>>, %arg2: memref<18xf32, #tpu.memory_space<smem>>, %arg3: memref<2x128xf32, #tpu.memory_space<vmem>>, %arg4: memref<2x128xf32, #tpu.memory_space<vmem>>) attributes {dimension_semantics = [#tpu.dimension_semantics<parallel>], iteration_bounds = array<i64: 1>, scalar_prefetch = 0 : i64, scratch_operands = 0 : i64, tpu.core_type = #tpu.core_type<tc>, window_params = [{transform_indices = @transform_0, window_bounds = array<i64: 18>}, {transform_indices = @transform_1, window_bounds = array<i64: 18>}, {transform_indices = @transform_2, window_bounds = array<i64: 2, 128>}, {transform_indices = @transform_3, window_bounds = array<i64: 2, 128>}]} {
    %c0 = arith.constant 0 : index
    %c0_0 = arith.constant 0 : index
    %0 = vector.load %arg3[%c0, %c0_0] : memref<2x128xf32, #tpu.memory_space<vmem>>, vector<2x128xf32>
    %cst = arith.constant 6.250000e+00 : f32
    %1 = vector.broadcast %cst : f32 to vector<2x128xf32>
    %2 = arith.cmpf ole, %0, %1 : vector<2x128xf32>
    %c0_1 = arith.constant 0 : index
    %3 = memref.load %arg1[%c0_1] : memref<18xf32, #tpu.memory_space<smem>>
    %cst_2 = arith.constant 0.000000e+00 : f32
    %4 = vector.broadcast %3 : f32 to vector<2x128xf32>
    %5 = vector.broadcast %cst_2 : f32 to vector<2x128xf32>
    %6 = arith.select %2, %4, %5 : vector<2x128xi1>, vector<2x128xf32>
    %c0_3 = arith.constant 0 : index
    %7 = memref.load %arg2[%c0_3] : memref<18xf32, #tpu.memory_space<smem>>
    %cst_4 = arith.constant 6.250000e+00 : f32
    %8 = arith.addf %cst_4, %7 : f32
    %cst_5 = arith.constant 6.250000e+00 : f32
    %9 = vector.broadcast %8 : f32 to vector<2x128xf32>
    %10 = vector.broadcast %cst_5 : f32 to vector<2x128xf32>
    %11 = arith.select %2, %9, %10 : vector<2x128xi1>, vector<2x128xf32>
    %cst_6 = arith.constant -0.000000e+00 : f32
    %12 = vector.broadcast %cst_6 : f32 to vector<2x128xf32>
    %13 = arith.cmpf ole, %0, %12 : vector<2x128xf32>
    %c1 = arith.constant 1 : index
    %14 = memref.load %arg1[%c1] : memref<18xf32, #tpu.memory_space<smem>>
    %cst_7 = arith.constant 0.000000e+00 : f32
    %15 = vector.broadcast %14 : f32 to vector<2x128xf32>
    %16 = vector.broadcast %cst_7 : f32 to vector<2x128xf32>
    %17 = arith.select %13, %15, %16 : vector<2x128xi1>, vector<2x128xf32>
    %18 = arith.addf %6, %17 : vector<2x128xf32>
    %c1_8 = arith.constant 1 : index
    %19 = memref.load %arg2[%c1_8] : memref<18xf32, #tpu.memory_space<smem>>
    %cst_9 = arith.constant 0.000000e+00 : f32
    %20 = vector.broadcast %19 : f32 to vector<2x128xf32>
    %21 = vector.broadcast %cst_9 : f32 to vector<2x128xf32>
    %22 = arith.select %13, %20, %21 : vector<2x128xi1>, vector<2x128xf32>
    %23 = arith.addf %11, %22 : vector<2x128xf32>
    %cst_10 = arith.constant -6.250000e+00 : f32
    %24 = vector.broadcast %cst_10 : f32 to vector<2x128xf32>
    %25 = arith.cmpf ole, %0, %24 : vector<2x128xf32>
    %c2 = arith.constant 2 : index
    %26 = memref.load %arg1[%c2] : memref<18xf32, #tpu.memory_space<smem>>
    %cst_11 = arith.constant 0.000000e+00 : f32
    %27 = vector.broadcast %26 : f32 to vector<2x128xf32>
    %28 = vector.broadcast %cst_11 : f32 to vector<2x128xf32>
    %29 = arith.select %25, %27, %28 : vector<2x128xi1>, vector<2x128xf32>
    %30 = arith.addf %18, %29 : vector<2x128xf32>
    %c2_12 = arith.constant 2 : index
    %31 = memref.load %arg2[%c2_12] : memref<18xf32, #tpu.memory_space<smem>>
    %cst_13 = arith.constant 0.000000e+00 : f32
    %32 = vector.broadcast %31 : f32 to vector<2x128xf32>
    %33 = vector.broadcast %cst_13 : f32 to vector<2x128xf32>
    %34 = arith.select %25, %32, %33 : vector<2x128xi1>, vector<2x128xf32>
    %35 = arith.addf %23, %34 : vector<2x128xf32>
    %cst_14 = arith.constant -1.250000e+01 : f32
    %36 = vector.broadcast %cst_14 : f32 to vector<2x128xf32>
    %37 = arith.cmpf ole, %0, %36 : vector<2x128xf32>
    %c3 = arith.constant 3 : index
    %38 = memref.load %arg1[%c3] : memref<18xf32, #tpu.memory_space<smem>>
    %cst_15 = arith.constant 0.000000e+00 : f32
    %39 = vector.broadcast %38 : f32 to vector<2x128xf32>
    %40 = vector.broadcast %cst_15 : f32 to vector<2x128xf32>
    %41 = arith.select %37, %39, %40 : vector<2x128xi1>, vector<2x128xf32>
    %42 = arith.addf %30, %41 : vector<2x128xf32>
    %c3_16 = arith.constant 3 : index
    %43 = memref.load %arg2[%c3_16] : memref<18xf32, #tpu.memory_space<smem>>
    %cst_17 = arith.constant 0.000000e+00 : f32
    %44 = vector.broadcast %43 : f32 to vector<2x128xf32>
    %45 = vector.broadcast %cst_17 : f32 to vector<2x128xf32>
    %46 = arith.select %37, %44, %45 : vector<2x128xi1>, vector<2x128xf32>
    %47 = arith.addf %35, %46 : vector<2x128xf32>
    %cst_18 = arith.constant -1.875000e+01 : f32
    %48 = vector.broadcast %cst_18 : f32 to vector<2x128xf32>
    %49 = arith.cmpf ole, %0, %48 : vector<2x128xf32>
    %c4 = arith.constant 4 : index
    %50 = memref.load %arg1[%c4] : memref<18xf32, #tpu.memory_space<smem>>
    %cst_19 = arith.constant 0.000000e+00 : f32
    %51 = vector.broadcast %50 : f32 to vector<2x128xf32>
    %52 = vector.broadcast %cst_19 : f32 to vector<2x128xf32>
    %53 = arith.select %49, %51, %52 : vector<2x128xi1>, vector<2x128xf32>
    %54 = arith.addf %42, %53 : vector<2x128xf32>
    %c4_20 = arith.constant 4 : index
    %55 = memref.load %arg2[%c4_20] : memref<18xf32, #tpu.memory_space<smem>>
    %cst_21 = arith.constant 0.000000e+00 : f32
    %56 = vector.broadcast %55 : f32 to vector<2x128xf32>
    %57 = vector.broadcast %cst_21 : f32 to vector<2x128xf32>
    %58 = arith.select %49, %56, %57 : vector<2x128xi1>, vector<2x128xf32>
    %59 = arith.addf %47, %58 : vector<2x128xf32>
    %cst_22 = arith.constant -2.500000e+01 : f32
    %60 = vector.broadcast %cst_22 : f32 to vector<2x128xf32>
    %61 = arith.cmpf ole, %0, %60 : vector<2x128xf32>
    %c5 = arith.constant 5 : index
    %62 = memref.load %arg1[%c5] : memref<18xf32, #tpu.memory_space<smem>>
    %cst_23 = arith.constant 0.000000e+00 : f32
    %63 = vector.broadcast %62 : f32 to vector<2x128xf32>
    %64 = vector.broadcast %cst_23 : f32 to vector<2x128xf32>
    %65 = arith.select %61, %63, %64 : vector<2x128xi1>, vector<2x128xf32>
    %66 = arith.addf %54, %65 : vector<2x128xf32>
    %c5_24 = arith.constant 5 : index
    %67 = memref.load %arg2[%c5_24] : memref<18xf32, #tpu.memory_space<smem>>
    %cst_25 = arith.constant 0.000000e+00 : f32
    %68 = vector.broadcast %67 : f32 to vector<2x128xf32>
    %69 = vector.broadcast %cst_25 : f32 to vector<2x128xf32>
    %70 = arith.select %61, %68, %69 : vector<2x128xi1>, vector<2x128xf32>
    %71 = arith.addf %59, %70 : vector<2x128xf32>
    %cst_26 = arith.constant -3.125000e+01 : f32
    %72 = vector.broadcast %cst_26 : f32 to vector<2x128xf32>
    %73 = arith.cmpf ole, %0, %72 : vector<2x128xf32>
    %c6 = arith.constant 6 : index
    %74 = memref.load %arg1[%c6] : memref<18xf32, #tpu.memory_space<smem>>
    %cst_27 = arith.constant 0.000000e+00 : f32
    %75 = vector.broadcast %74 : f32 to vector<2x128xf32>
    %76 = vector.broadcast %cst_27 : f32 to vector<2x128xf32>
    %77 = arith.select %73, %75, %76 : vector<2x128xi1>, vector<2x128xf32>
    %78 = arith.addf %66, %77 : vector<2x128xf32>
    %c6_28 = arith.constant 6 : index
    %79 = memref.load %arg2[%c6_28] : memref<18xf32, #tpu.memory_space<smem>>
    %cst_29 = arith.constant 0.000000e+00 : f32
    %80 = vector.broadcast %79 : f32 to vector<2x128xf32>
    %81 = vector.broadcast %cst_29 : f32 to vector<2x128xf32>
    %82 = arith.select %73, %80, %81 : vector<2x128xi1>, vector<2x128xf32>
    %83 = arith.addf %71, %82 : vector<2x128xf32>
    %cst_30 = arith.constant -3.750000e+01 : f32
    %84 = vector.broadcast %cst_30 : f32 to vector<2x128xf32>
    %85 = arith.cmpf ole, %0, %84 : vector<2x128xf32>
    %c7 = arith.constant 7 : index
    %86 = memref.load %arg1[%c7] : memref<18xf32, #tpu.memory_space<smem>>
    %cst_31 = arith.constant 0.000000e+00 : f32
    %87 = vector.broadcast %86 : f32 to vector<2x128xf32>
    %88 = vector.broadcast %cst_31 : f32 to vector<2x128xf32>
    %89 = arith.select %85, %87, %88 : vector<2x128xi1>, vector<2x128xf32>
    %90 = arith.addf %78, %89 : vector<2x128xf32>
    %c7_32 = arith.constant 7 : index
    %91 = memref.load %arg2[%c7_32] : memref<18xf32, #tpu.memory_space<smem>>
    %cst_33 = arith.constant 0.000000e+00 : f32
    %92 = vector.broadcast %91 : f32 to vector<2x128xf32>
    %93 = vector.broadcast %cst_33 : f32 to vector<2x128xf32>
    %94 = arith.select %85, %92, %93 : vector<2x128xi1>, vector<2x128xf32>
    %95 = arith.addf %83, %94 : vector<2x128xf32>
    %cst_34 = arith.constant -4.375000e+01 : f32
    %96 = vector.broadcast %cst_34 : f32 to vector<2x128xf32>
    %97 = arith.cmpf ole, %0, %96 : vector<2x128xf32>
    %c8 = arith.constant 8 : index
    %98 = memref.load %arg1[%c8] : memref<18xf32, #tpu.memory_space<smem>>
    %cst_35 = arith.constant 0.000000e+00 : f32
    %99 = vector.broadcast %98 : f32 to vector<2x128xf32>
    %100 = vector.broadcast %cst_35 : f32 to vector<2x128xf32>
    %101 = arith.select %97, %99, %100 : vector<2x128xi1>, vector<2x128xf32>
    %102 = arith.addf %90, %101 : vector<2x128xf32>
    %c8_36 = arith.constant 8 : index
    %103 = memref.load %arg2[%c8_36] : memref<18xf32, #tpu.memory_space<smem>>
    %cst_37 = arith.constant 0.000000e+00 : f32
    %104 = vector.broadcast %103 : f32 to vector<2x128xf32>
    %105 = vector.broadcast %cst_37 : f32 to vector<2x128xf32>
    %106 = arith.select %97, %104, %105 : vector<2x128xi1>, vector<2x128xf32>
    %107 = arith.addf %95, %106 : vector<2x128xf32>
    %cst_38 = arith.constant -5.000000e+01 : f32
    %108 = vector.broadcast %cst_38 : f32 to vector<2x128xf32>
    %109 = arith.cmpf ole, %0, %108 : vector<2x128xf32>
    %c9 = arith.constant 9 : index
    %110 = memref.load %arg1[%c9] : memref<18xf32, #tpu.memory_space<smem>>
    %cst_39 = arith.constant 0.000000e+00 : f32
    %111 = vector.broadcast %110 : f32 to vector<2x128xf32>
    %112 = vector.broadcast %cst_39 : f32 to vector<2x128xf32>
    %113 = arith.select %109, %111, %112 : vector<2x128xi1>, vector<2x128xf32>
    %114 = arith.addf %102, %113 : vector<2x128xf32>
    %c9_40 = arith.constant 9 : index
    %115 = memref.load %arg2[%c9_40] : memref<18xf32, #tpu.memory_space<smem>>
    %cst_41 = arith.constant 0.000000e+00 : f32
    %116 = vector.broadcast %115 : f32 to vector<2x128xf32>
    %117 = vector.broadcast %cst_41 : f32 to vector<2x128xf32>
    %118 = arith.select %109, %116, %117 : vector<2x128xi1>, vector<2x128xf32>
    %119 = arith.addf %107, %118 : vector<2x128xf32>
    %cst_42 = arith.constant -5.625000e+01 : f32
    %120 = vector.broadcast %cst_42 : f32 to vector<2x128xf32>
    %121 = arith.cmpf ole, %0, %120 : vector<2x128xf32>
    %c10 = arith.constant 10 : index
    %122 = memref.load %arg1[%c10] : memref<18xf32, #tpu.memory_space<smem>>
    %cst_43 = arith.constant 0.000000e+00 : f32
    %123 = vector.broadcast %122 : f32 to vector<2x128xf32>
    %124 = vector.broadcast %cst_43 : f32 to vector<2x128xf32>
    %125 = arith.select %121, %123, %124 : vector<2x128xi1>, vector<2x128xf32>
    %126 = arith.addf %114, %125 : vector<2x128xf32>
    %c10_44 = arith.constant 10 : index
    %127 = memref.load %arg2[%c10_44] : memref<18xf32, #tpu.memory_space<smem>>
    %cst_45 = arith.constant 0.000000e+00 : f32
    %128 = vector.broadcast %127 : f32 to vector<2x128xf32>
    %129 = vector.broadcast %cst_45 : f32 to vector<2x128xf32>
    %130 = arith.select %121, %128, %129 : vector<2x128xi1>, vector<2x128xf32>
    %131 = arith.addf %119, %130 : vector<2x128xf32>
    %cst_46 = arith.constant -6.250000e+01 : f32
    %132 = vector.broadcast %cst_46 : f32 to vector<2x128xf32>
    %133 = arith.cmpf ole, %0, %132 : vector<2x128xf32>
    %c11 = arith.constant 11 : index
    %134 = memref.load %arg1[%c11] : memref<18xf32, #tpu.memory_space<smem>>
    %cst_47 = arith.constant 0.000000e+00 : f32
    %135 = vector.broadcast %134 : f32 to vector<2x128xf32>
    %136 = vector.broadcast %cst_47 : f32 to vector<2x128xf32>
    %137 = arith.select %133, %135, %136 : vector<2x128xi1>, vector<2x128xf32>
    %138 = arith.addf %126, %137 : vector<2x128xf32>
    %c11_48 = arith.constant 11 : index
    %139 = memref.load %arg2[%c11_48] : memref<18xf32, #tpu.memory_space<smem>>
    %cst_49 = arith.constant 0.000000e+00 : f32
    %140 = vector.broadcast %139 : f32 to vector<2x128xf32>
    %141 = vector.broadcast %cst_49 : f32 to vector<2x128xf32>
    %142 = arith.select %133, %140, %141 : vector<2x128xi1>, vector<2x128xf32>
    %143 = arith.addf %131, %142 : vector<2x128xf32>
    %cst_50 = arith.constant -6.875000e+01 : f32
    %144 = vector.broadcast %cst_50 : f32 to vector<2x128xf32>
    %145 = arith.cmpf ole, %0, %144 : vector<2x128xf32>
    %c12 = arith.constant 12 : index
    %146 = memref.load %arg1[%c12] : memref<18xf32, #tpu.memory_space<smem>>
    %cst_51 = arith.constant 0.000000e+00 : f32
    %147 = vector.broadcast %146 : f32 to vector<2x128xf32>
    %148 = vector.broadcast %cst_51 : f32 to vector<2x128xf32>
    %149 = arith.select %145, %147, %148 : vector<2x128xi1>, vector<2x128xf32>
    %150 = arith.addf %138, %149 : vector<2x128xf32>
    %c12_52 = arith.constant 12 : index
    %151 = memref.load %arg2[%c12_52] : memref<18xf32, #tpu.memory_space<smem>>
    %cst_53 = arith.constant 0.000000e+00 : f32
    %152 = vector.broadcast %151 : f32 to vector<2x128xf32>
    %153 = vector.broadcast %cst_53 : f32 to vector<2x128xf32>
    %154 = arith.select %145, %152, %153 : vector<2x128xi1>, vector<2x128xf32>
    %155 = arith.addf %143, %154 : vector<2x128xf32>
    %cst_54 = arith.constant -7.500000e+01 : f32
    %156 = vector.broadcast %cst_54 : f32 to vector<2x128xf32>
    %157 = arith.cmpf ole, %0, %156 : vector<2x128xf32>
    %c13 = arith.constant 13 : index
    %158 = memref.load %arg1[%c13] : memref<18xf32, #tpu.memory_space<smem>>
    %cst_55 = arith.constant 0.000000e+00 : f32
    %159 = vector.broadcast %158 : f32 to vector<2x128xf32>
    %160 = vector.broadcast %cst_55 : f32 to vector<2x128xf32>
    %161 = arith.select %157, %159, %160 : vector<2x128xi1>, vector<2x128xf32>
    %162 = arith.addf %150, %161 : vector<2x128xf32>
    %c13_56 = arith.constant 13 : index
    %163 = memref.load %arg2[%c13_56] : memref<18xf32, #tpu.memory_space<smem>>
    %cst_57 = arith.constant 0.000000e+00 : f32
    %164 = vector.broadcast %163 : f32 to vector<2x128xf32>
    %165 = vector.broadcast %cst_57 : f32 to vector<2x128xf32>
    %166 = arith.select %157, %164, %165 : vector<2x128xi1>, vector<2x128xf32>
    %167 = arith.addf %155, %166 : vector<2x128xf32>
    %cst_58 = arith.constant -8.125000e+01 : f32
    %168 = vector.broadcast %cst_58 : f32 to vector<2x128xf32>
    %169 = arith.cmpf ole, %0, %168 : vector<2x128xf32>
    %c14 = arith.constant 14 : index
    %170 = memref.load %arg1[%c14] : memref<18xf32, #tpu.memory_space<smem>>
    %cst_59 = arith.constant 0.000000e+00 : f32
    %171 = vector.broadcast %170 : f32 to vector<2x128xf32>
    %172 = vector.broadcast %cst_59 : f32 to vector<2x128xf32>
    %173 = arith.select %169, %171, %172 : vector<2x128xi1>, vector<2x128xf32>
    %174 = arith.addf %162, %173 : vector<2x128xf32>
    %c14_60 = arith.constant 14 : index
    %175 = memref.load %arg2[%c14_60] : memref<18xf32, #tpu.memory_space<smem>>
    %cst_61 = arith.constant 0.000000e+00 : f32
    %176 = vector.broadcast %175 : f32 to vector<2x128xf32>
    %177 = vector.broadcast %cst_61 : f32 to vector<2x128xf32>
    %178 = arith.select %169, %176, %177 : vector<2x128xi1>, vector<2x128xf32>
    %179 = arith.addf %167, %178 : vector<2x128xf32>
    %cst_62 = arith.constant -8.750000e+01 : f32
    %180 = vector.broadcast %cst_62 : f32 to vector<2x128xf32>
    %181 = arith.cmpf ole, %0, %180 : vector<2x128xf32>
    %c15 = arith.constant 15 : index
    %182 = memref.load %arg1[%c15] : memref<18xf32, #tpu.memory_space<smem>>
    %cst_63 = arith.constant 0.000000e+00 : f32
    %183 = vector.broadcast %182 : f32 to vector<2x128xf32>
    %184 = vector.broadcast %cst_63 : f32 to vector<2x128xf32>
    %185 = arith.select %181, %183, %184 : vector<2x128xi1>, vector<2x128xf32>
    %186 = arith.addf %174, %185 : vector<2x128xf32>
    %c15_64 = arith.constant 15 : index
    %187 = memref.load %arg2[%c15_64] : memref<18xf32, #tpu.memory_space<smem>>
    %cst_65 = arith.constant 0.000000e+00 : f32
    %188 = vector.broadcast %187 : f32 to vector<2x128xf32>
    %189 = vector.broadcast %cst_65 : f32 to vector<2x128xf32>
    %190 = arith.select %181, %188, %189 : vector<2x128xi1>, vector<2x128xf32>
    %191 = arith.addf %179, %190 : vector<2x128xf32>
    %cst_66 = arith.constant -9.375000e+01 : f32
    %192 = vector.broadcast %cst_66 : f32 to vector<2x128xf32>
    %193 = arith.cmpf ole, %0, %192 : vector<2x128xf32>
    %c16 = arith.constant 16 : index
    %194 = memref.load %arg1[%c16] : memref<18xf32, #tpu.memory_space<smem>>
    %cst_67 = arith.constant 0.000000e+00 : f32
    %195 = vector.broadcast %194 : f32 to vector<2x128xf32>
    %196 = vector.broadcast %cst_67 : f32 to vector<2x128xf32>
    %197 = arith.select %193, %195, %196 : vector<2x128xi1>, vector<2x128xf32>
    %198 = arith.addf %186, %197 : vector<2x128xf32>
    %c16_68 = arith.constant 16 : index
    %199 = memref.load %arg2[%c16_68] : memref<18xf32, #tpu.memory_space<smem>>
    %cst_69 = arith.constant 0.000000e+00 : f32
    %200 = vector.broadcast %199 : f32 to vector<2x128xf32>
    %201 = vector.broadcast %cst_69 : f32 to vector<2x128xf32>
    %202 = arith.select %193, %200, %201 : vector<2x128xi1>, vector<2x128xf32>
    %203 = arith.addf %191, %202 : vector<2x128xf32>
    %cst_70 = arith.constant -1.000000e+02 : f32
    %204 = vector.broadcast %cst_70 : f32 to vector<2x128xf32>
    %205 = arith.cmpf ole, %0, %204 : vector<2x128xf32>
    %c17 = arith.constant 17 : index
    %206 = memref.load %arg1[%c17] : memref<18xf32, #tpu.memory_space<smem>>
    %cst_71 = arith.constant 0.000000e+00 : f32
    %207 = vector.broadcast %206 : f32 to vector<2x128xf32>
    %208 = vector.broadcast %cst_71 : f32 to vector<2x128xf32>
    %209 = arith.select %205, %207, %208 : vector<2x128xi1>, vector<2x128xf32>
    %210 = arith.addf %198, %209 : vector<2x128xf32>
    %c17_72 = arith.constant 17 : index
    %211 = memref.load %arg2[%c17_72] : memref<18xf32, #tpu.memory_space<smem>>
    %cst_73 = arith.constant 0.000000e+00 : f32
    %212 = vector.broadcast %211 : f32 to vector<2x128xf32>
    %213 = vector.broadcast %cst_73 : f32 to vector<2x128xf32>
    %214 = arith.select %205, %212, %213 : vector<2x128xi1>, vector<2x128xf32>
    %215 = arith.addf %203, %214 : vector<2x128xf32>
    %216 = arith.mulf %210, %0 : vector<2x128xf32>
    %217 = arith.addf %216, %215 : vector<2x128xf32>
    %c0_74 = arith.constant 0 : index
    %c0_75 = arith.constant 0 : index
    %218 = vector.load %arg4[%c0_74, %c0_75] : memref<2x128xf32, #tpu.memory_space<vmem>>, vector<2x128xf32>
    tpu.vector_store %arg4[%c0_74, %c0_75], %217 {strides = array<i32>} : memref<2x128xf32, #tpu.memory_space<vmem>>, vector<2x128xf32>,
    return
  }
  func.func @transform_0(%arg0: i32) -> i32 {
    %c0_i32 = arith.constant 0 : i32
    %c0_i32_0 = arith.constant 0 : i32
    return %c0_i32 : i32
  }
  func.func @transform_1(%arg0: i32) -> i32 {
    %c0_i32 = arith.constant 0 : i32
    %c0_i32_0 = arith.constant 0 : i32
    return %c0_i32 : i32
  }
  func.func @transform_2(%arg0: i32) -> (i32, i32) {
    %c0_i32 = arith.constant 0 : i32
    %c0_i32_0 = arith.constant 0 : i32
    return %arg0, %c0_i32 : i32, i32
  }
  func.func @transform_3(%arg0: i32) -> (i32, i32) {
    %c0_i32 = arith.constant 0 : i32
    %c0_i32_0 = arith.constant 0 : i32
    return %arg0, %c0_i32 : i32, i32
  }
}

</mosaic_0001>

<llo_original>
// kernel: tpu_custom_call.1
$region0: #{tpu_custom_call.1}
  #allocation0 [shape = 'u32[]', space=smem, size = 0x4, offset = 0x4, fixed_abs, tag = 'smem constant byte address 0x4 - core index']
  #allocation1 [shape = 'u32[144,128]{1,0:T(1,128)}', space=vmem, size = 0x12000, scoped, tag = 'internal scratch']
  %s0 = inlined_call_operand.hbm [shape: f32[18], index: 0, kind: input, shape index: {}]
  %s1 = inlined_call_operand.vmem [shape: f32[18], index: 1, kind: input, shape index: {}]
  %s2 = inlined_call_operand.vmem [shape: f32[2,128], index: 2, kind: input, shape index: {}]
  %s3 = inlined_call_operand.hbm [shape: f32[2,128], index: 3, kind: output, shape index: {}]
  %s4 = sld [smem:[#allocation0]]
  $region30: #{tpu_custom_call.1} parent=0
    _
  %s6 = ssub.s32 1, %s4
  %s7 = scalar_select 0, %s6, %s4
  $region1: #{tpu_custom_call.1} parent=0
    #allocation2 [shape = 'u8[512]{0}', space=smem, size = 0x200, scoped, tag = 'input window, operand 0, single buffered']
    #allocation3 [shape = 's32[1]{0}', space=sflag, size = 0x4, scoped, tag = 'scoped memory for tpu_custom_call.1']
    #allocation4 [shape = 's32[1]{0}', space=sflag, size = 0x4, scoped, tag = 'scoped memory for tpu_custom_call.1']
    #allocation5 [shape = 's32[1]{0}', space=sflag, size = 0x4, scoped, tag = 'scoped memory for tpu_custom_call.1']
    #allocation6 [shape = 'u8[512]{0}', space=smem, size = 0x200, scoped, tag = 'input window, operand 1, single buffered']
    #allocation7 [shape = 'u8[1024]{0}', space=vmem, size = 0x400, scoped, tag = 'output window, operand 0, single buffered']
    %8 = vsyncpa [#allocation4], 0
    %9 = vsyncpa [#allocation5], 0
    %10 = vsyncpa [#allocation3], 0
    // Predicated region
    $region2: #{tpu_custom_call.1} parent=1 // pred_check
      _
    $region3: #{tpu_custom_call.1} parent=1 // pred_check_branch
      %12 = sbr.rel (0) target = $region5
    $region4: #{tpu_custom_call.1} parent=1 // pred_region
      %s14 = ssub.s32 16, 16
      %15 = vsyncadd [#allocation4], %s14
      %18 = dma.hbm_to_smem %s0, 16, [#allocation2], [#allocation4]
    $region5: #{tpu_custom_call.1} parent=1 // pred_fallthru
      _
    // Predicated region
    $region6: #{tpu_custom_call.1} parent=1 // pred_check
      _
    $region7: #{tpu_custom_call.1} parent=1 // pred_check_branch
      %20 = sbr.rel (0) target = $region9
    $region8: #{tpu_custom_call.1} parent=1 // pred_region
      %s22 = ssub.s32 16, 16
      %23 = vsyncadd [#allocation5], %s22
      %s25 = sshll.u32 %s1, 4
      %s26 = int_to_ptr.vmem [resolvable:$true] %s25
      %28 = dma.vmem_to_smem %s26, 16, [#allocation6], [#allocation5]
    $region9: #{tpu_custom_call.1} parent=1 // pred_fallthru
      _
    // Predicated region
    $region10: #{tpu_custom_call.1} parent=1 // pred_check
      _
    $region11: #{tpu_custom_call.1} parent=1 // pred_check_branch
      %30 = sbr.rel (0) target = $region13
    $region12: #{tpu_custom_call.1} parent=1 // pred_region
      _
    $region13: #{tpu_custom_call.1} parent=1 // pred_fallthru
      _
    // Predicated region
    $region14: #{tpu_custom_call.1} parent=1 // pred_check
      _
    $region15: #{tpu_custom_call.1} parent=1 // pred_check_branch
      %32 = sbr.rel (0) target = $region17
    $region16: #{tpu_custom_call.1} parent=1 // pred_region
      %33 = dma.done [#allocation4], 16
    $region17: #{tpu_custom_call.1} parent=1 // pred_fallthru
      _
    // Predicated region
    $region18: #{tpu_custom_call.1} parent=1 // pred_check
      _
    $region19: #{tpu_custom_call.1} parent=1 // pred_check_branch
      %35 = sbr.rel (0) target = $region21
    $region20: #{tpu_custom_call.1} parent=1 // pred_region
      %36 = dma.done [#allocation5], 16
    $region21: #{tpu_custom_call.1} parent=1 // pred_fallthru
      _
    %37 = sfence
    %v38 = vld [vmem:[%s2] sm:$0x3]
    %vm39 = vcmp.le.f32.partialorder %v38, 6.25
    %s40 = sld [smem:[#allocation2]]
    %v41 = vstv %s40
    %v42 = vsel %vm39, %v41, 0.0
    %s43 = sld [smem:[#allocation6]]
    %s44 = sadd.f32 %s43, 6.25
    %v45 = vstv %s44
    %v46 = vsel %vm39, %v45, 6.25
    %vm47 = vcmp.le.f32.partialorder %v38, -0.0
    %s48 = sld [smem:[#allocation2 + $0x1]]
    %v49 = vstv %s48
    %v50 = vsel %vm47, %v49, 0.0
    %v51 = vadd.f32 %v42, %v50
    %s52 = sld [smem:[#allocation6 + $0x1]]
    %v53 = vstv %s52
    %v54 = vsel %vm47, %v53, 0.0
    %v55 = vadd.f32 %v46, %v54
    %vm56 = vcmp.le.f32.partialorder %v38, -6.25
    %s57 = sld [smem:[#allocation2 + $0x2]]
    %v58 = vstv %s57
    %v59 = vsel %vm56, %v58, 0.0
    %v60 = vadd.f32 %v51, %v59
    %s61 = sld [smem:[#allocation6 + $0x2]]
    %v62 = vstv %s61
    %v63 = vsel %vm56, %v62, 0.0
    %v64 = vadd.f32 %v55, %v63
    %vm65 = vcmp.le.f32.partialorder %v38, -12.5
    %s66 = sld [smem:[#allocation2 + $0x3]]
    %v67 = vstv %s66
    %v68 = vsel %vm65, %v67, 0.0
    %v69 = vadd.f32 %v60, %v68
    %s70 = sld [smem:[#allocation6 + $0x3]]
    %v71 = vstv %s70
    %v72 = vsel %vm65, %v71, 0.0
    %v73 = vadd.f32 %v64, %v72
    %vm74 = vcmp.le.f32.partialorder %v38, -18.75
    %s75 = sld [smem:[#allocation2 + $0x4]]
    %v76 = vstv %s75
    %v77 = vsel %vm74, %v76, 0.0
    %v78 = vadd.f32 %v69, %v77
    %s79 = sld [smem:[#allocation6 + $0x4]]
    %v80 = vstv %s79
    %v81 = vsel %vm74, %v80, 0.0
    %v82 = vadd.f32 %v73, %v81
    %vm83 = vcmp.le.f32.partialorder %v38, -25.0
    %s84 = sld [smem:[#allocation2 + $0x5]]
    %v85 = vstv %s84
    %v86 = vsel %vm83, %v85, 0.0
    %v87 = vadd.f32 %v78, %v86
    %s88 = sld [smem:[#allocation6 + $0x5]]
    %v89 = vstv %s88
    %v90 = vsel %vm83, %v89, 0.0
    %v91 = vadd.f32 %v82, %v90
    %vm92 = vcmp.le.f32.partialorder %v38, -31.25
    %s93 = sld [smem:[#allocation2 + $0x6]]
    %v94 = vstv %s93
    %v95 = vsel %vm92, %v94, 0.0
    %v96 = vadd.f32 %v87, %v95
    %s97 = sld [smem:[#allocation6 + $0x6]]
    %v98 = vstv %s97
    %v99 = vsel %vm92, %v98, 0.0
    %v100 = vadd.f32 %v91, %v99
    %vm101 = vcmp.le.f32.partialorder %v38, -37.5
    %s102 = sld [smem:[#allocation2 + $0x7]]
    %v103 = vstv %s102
    %v104 = vsel %vm101, %v103, 0.0
    %v105 = vadd.f32 %v96, %v104
    %s106 = sld [smem:[#allocation6 + $0x7]]
    %v107 = vstv %s106
    %v108 = vsel %vm101, %v107, 0.0
    %v109 = vadd.f32 %v100, %v108
    %vm110 = vcmp.le.f32.partialorder %v38, -43.75
    %s111 = sld [smem:[#allocation2 + $0x8]]
    %v112 = vstv %s111
    %v113 = vsel %vm110, %v112, 0.0
    %v114 = vadd.f32 %v105, %v113
    %s115 = sld [smem:[#allocation6 + $0x8]]
    %v116 = vstv %s115
    %v117 = vsel %vm110, %v116, 0.0
    %v118 = vadd.f32 %v109, %v117
    %vm119 = vcmp.le.f32.partialorder %v38, -50.0
    %s120 = sld [smem:[#allocation2 + $0x9]]
    %v121 = vstv %s120
    %v122 = vsel %vm119, %v121, 0.0
    %v123 = vadd.f32 %v114, %v122
    %s124 = sld [smem:[#allocation6 + $0x9]]
    %v125 = vstv %s124
    %v126 = vsel %vm119, %v125, 0.0
    %v127 = vadd.f32 %v118, %v126
    %vm128 = vcmp.le.f32.partialorder %v38, -56.25
    %s129 = sld [smem:[#allocation2 + $0xa]]
    %v130 = vstv %s129
    %v131 = vsel %vm128, %v130, 0.0
    %v132 = vadd.f32 %v123, %v131
    %s133 = sld [smem:[#allocation6 + $0xa]]
    %v134 = vstv %s133
    %v135 = vsel %vm128, %v134, 0.0
    %v136 = vadd.f32 %v127, %v135
    %vm137 = vcmp.le.f32.partialorder %v38, -62.5
    %s138 = sld [smem:[#allocation2 + $0xb]]
    %v139 = vstv %s138
    %v140 = vsel %vm137, %v139, 0.0
    %v141 = vadd.f32 %v132, %v140
    %s142 = sld [smem:[#allocation6 + $0xb]]
    %v143 = vstv %s142
    %v144 = vsel %vm137, %v143, 0.0
    %v145 = vadd.f32 %v136, %v144
    %vm146 = vcmp.le.f32.partialorder %v38, -68.75
    %s147 = sld [smem:[#allocation2 + $0xc]]
    %v148 = vstv %s147
    %v149 = vsel %vm146, %v148, 0.0
    %v150 = vadd.f32 %v141, %v149
    %s151 = sld [smem:[#allocation6 + $0xc]]
    %v152 = vstv %s151
    %v153 = vsel %vm146, %v152, 0.0
    %v154 = vadd.f32 %v145, %v153
    %vm155 = vcmp.le.f32.partialorder %v38, -75.0
    %s156 = sld [smem:[#allocation2 + $0xd]]
    %v157 = vstv %s156
    %v158 = vsel %vm155, %v157, 0.0
    %v159 = vadd.f32 %v150, %v158
    %s160 = sld [smem:[#allocation6 + $0xd]]
    %v161 = vstv %s160
    %v162 = vsel %vm155, %v161, 0.0
    %v163 = vadd.f32 %v154, %v162
    %vm164 = vcmp.le.f32.partialorder %v38, -81.25
    %s165 = sld [smem:[#allocation2 + $0xe]]
    %v166 = vstv %s165
    %v167 = vsel %vm164, %v166, 0.0
    %v168 = vadd.f32 %v159, %v167
    %s169 = sld [smem:[#allocation6 + $0xe]]
    %v170 = vstv %s169
    %v171 = vsel %vm164, %v170, 0.0
    %v172 = vadd.f32 %v163, %v171
    %vm173 = vcmp.le.f32.partialorder %v38, -87.5
    %s174 = sld [smem:[#allocation2 + $0xf]]
    %v175 = vstv %s174
    %v176 = vsel %vm173, %v175, 0.0
    %v177 = vadd.f32 %v168, %v176
    %s178 = sld [smem:[#allocation6 + $0xf]]
    %v179 = vstv %s178
    %v180 = vsel %vm173, %v179, 0.0
    %v181 = vadd.f32 %v172, %v180
    %vm182 = vcmp.le.f32.partialorder %v38, -93.75
    %s183 = sld [smem:[#allocation2 + $0x10]]
    %v184 = vstv %s183
    %v185 = vsel %vm182, %v184, 0.0
    %v186 = vadd.f32 %v177, %v185
    %s187 = sld [smem:[#allocation6 + $0x10]]
    %v188 = vstv %s187
    %v189 = vsel %vm182, %v188, 0.0
    %v190 = vadd.f32 %v181, %v189
    %vm191 = vcmp.le.f32.partialorder %v38, -100.0
    %s192 = sld [smem:[#allocation2 + $0x11]]
    %v193 = vstv %s192
    %v194 = vsel %vm191, %v193, 0.0
    %v195 = vadd.f32 %v186, %v194
    %s196 = sld [smem:[#allocation6 + $0x11]]
    %v197 = vstv %s196
    %v198 = vsel %vm191, %v197, 0.0
    %v199 = vadd.f32 %v190, %v198
    %v200 = vmul.f32 %v195, %v38
    %v201 = vadd.f32 %v200, %v199
    %202 = vst [vmem:[#allocation7] sm:$0x3] %v201
    // Predicated region
    $region22: #{tpu_custom_call.1} parent=1 // pred_check
      _
    $region23: #{tpu_custom_call.1} parent=1 // pred_check_branch
      %204 = sbr.rel (0) target = $region25
    $region24: #{tpu_custom_call.1} parent=1 // pred_region
      %s206 = ssub.s32 32, 32
      %207 = vsyncadd [#allocation3], %s206
      %s209 = sshll.u32 [#allocation7], 4
      %s210 = int_to_ptr.vmem [resolvable:$true] %s209
      %212 = dma.vmem_to_hbm [thread:$0]  %s210, 32, %s3, [#allocation3]
    $region25: #{tpu_custom_call.1} parent=1 // pred_fallthru
      _
    // Predicated region
    $region26: #{tpu_custom_call.1} parent=1 // pred_check
      _
    $region27: #{tpu_custom_call.1} parent=1 // pred_check_branch
      %214 = sbr.rel (0) target = $region29
    $region28: #{tpu_custom_call.1} parent=1 // pred_region
      %215 = dma.done [#allocation3], 32
    $region29: #{tpu_custom_call.1} parent=1 // pred_fallthru
      _
    %216 = vsyncpa [#allocation3], 1
    %217 = vsyncpa [#allocation4], 1
    %218 = vsyncpa [#allocation5], 1

</llo_original>
